<compile_context>
chip_gen: v6e
topology: v6e:2x2x1
jax: 0.10.0
libtpu: 0.0.40
codegen_flags: <defaults>
</compile_context>

<pallas_src>
import functools

import jax
import jax.numpy as jnp
from jax import lax
from jax.experimental import pallas as pl
from jax.experimental.pallas import tpu as pltpu

_EPS = 1e-8  # torch.nn.CosineSimilarity default eps


def _loss_kernel(a_ref, p_ref, n_ref, o_ref, *, margin, n_neg, d):
    """One batch tile of the context-embedding loss.

    a_ref : (TB, D)      anchor tile
    p_ref : (TB, D)      positive tile
    n_ref : (TB, N*D)    negatives tile (flattened along the feature axis)
    o_ref : (1, TB)      per-row clamped loss for this tile (lane-dense)
    """
    a = a_ref[...].astype(jnp.float32)                       # (TB, D)
    p = p_ref[...].astype(jnp.float32)                       # (TB, D)

    eps2 = jnp.float32(_EPS * _EPS)

    # 1 / max(||a||, eps) == rsqrt(max(||a||^2, eps^2))  (sqrt is monotone)
    w_a = jnp.sum(a * a, axis=-1, keepdims=True)             # (TB, 1)
    inv_na = lax.rsqrt(jnp.maximum(w_a, eps2))                # (TB, 1)

    # ---- positive branch ---------------------------------------------------
    w_p = jnp.sum(p * p, axis=-1, keepdims=True)              # (TB, 1)
    w_ap = jnp.sum(a * p, axis=-1, keepdims=True)             # (TB, 1)
    pos = w_ap * inv_na * lax.rsqrt(jnp.maximum(w_p, eps2)) + 1.0   # (TB, 1)

    # ---- negatives: static loop over N lane-aligned D-chunks ----------------
    # Chunking keeps the f32 working set to ~TB*D (no (TB,N,D) temporaries).
    neg_sum = jnp.zeros_like(pos)                              # (TB, 1)
    for j in range(n_neg):                                     # static unroll (small N)
        x = n_ref[:, j * d:(j + 1) * d].astype(jnp.float32)    # (TB, D) aligned slice
        w_x = jnp.sum(x * x, axis=-1, keepdims=True)           # (TB, 1)
        w_ax = jnp.sum(a * x, axis=-1, keepdims=True)          # (TB, 1)
        cos = w_ax * inv_na * lax.rsqrt(jnp.maximum(w_x, eps2))
        neg_sum = neg_sum + (cos + 1.0)
    neg_mean = neg_sum * jnp.float32(1.0 / n_neg)              # (TB, 1)

    # ---- clamped margin loss, per row ---------------------------------------
    loss = jnp.maximum(neg_mean - pos + jnp.float32(margin), 0.0)   # (TB, 1)
    o_ref[...] = loss.reshape(1, -1)                            # (1, TB) lane-dense


def _round_up(x, m):
    return (x + m - 1) // m * m


def _pick_batch_tile(B, N, D, itemsize):
    """Largest sublane-aligned batch tile whose working set fits the VMEM budget."""
    # Sublane pack factor: 8 for 4-byte, 16 for 2-byte, 32 for 1-byte dtypes.
    pack = max(8, 32 // itemsize)

    # Per-row VMEM cost:
    #   * double-buffered input blocks in the input dtype (anchor + positive + negs)
    #   * f32 in-kernel working set: a, p, one negatives chunk + product temps
    row_bytes = 2 * (2 + N) * D * itemsize        # x2 for double buffering
    row_bytes += 6 * D * 4                        # bounded f32 temporaries

    budget = 40 * 1024 * 1024                     # safe on v7x (64 MiB VMEM / TC)
    tb = budget // max(row_bytes, 1)
    tb = max(pack, min(1024, int(tb)))
    tb = (tb // pack) * pack

    b_pad = _round_up(B, pack)
    # Keep >= 2 grid steps when the batch allows it so v7x's two TensorCores
    # both get work on the "parallel" axis.
    if b_pad >= 2 * pack:
        tb = min(tb, max(pack, (b_pad // 2 // pack) * pack))
    tb = min(tb, b_pad)
    return max(tb, pack)


def context_embedding_loss(anchor, positive, negatives, margin=0.2):
    """anchor/positive: (B, D), negatives: (B, N, D); f32 or bf16 inputs."""
    B, D = anchor.shape
    _, N, _ = negatives.shape
    itemsize = jnp.dtype(anchor.dtype).itemsize

    TB = _pick_batch_tile(B, N, D, itemsize)
    B_pad = _round_up(B, TB)
    num_blocks = B_pad // TB

    if B_pad != B:
        pad = B_pad - B
        anchor = jnp.pad(anchor, ((0, pad), (0, 0)))
        positive = jnp.pad(positive, ((0, pad), (0, 0)))
        negatives = jnp.pad(negatives, ((0, pad), (0, 0), (0, 0)))

    # Free reshape of a contiguous array: (B_pad, N, D) -> (B_pad, N*D).
    negatives_flat = negatives.reshape(B_pad, N * D)

    kernel = functools.partial(
        _loss_kernel, margin=float(margin), n_neg=int(N), d=int(D)
    )

    # VMEM limit derived from actual block + temp + output sizes, +25% headroom.
    block_bytes = 2 * TB * (2 + N) * D * itemsize              # double-buffered inputs
    out_bytes = 2 * _round_up(TB, 128) * 4                      # double-buffered output
    temp_bytes = 8 * TB * D * 4                                 # generous f32 working set
    vmem_limit = int(
        min(56 * 1024 * 1024,
            max(32 * 1024 * 1024, (block_bytes + out_bytes + temp_bytes) * 5 // 4))
    )

    bytes_accessed = (2 + N) * D * B_pad * itemsize + B_pad * 4
    cost = pl.CostEstimate(
        flops=int(6 * B_pad * D * (N + 1)),
        transcendentals=int(B_pad * (N + 2)),
        bytes_accessed=int(bytes_accessed),
    )

    per_row = pl.pallas_call(
        kernel,
        out_shape=jax.ShapeDtypeStruct((num_blocks, TB), jnp.float32),
        grid_spec=pltpu.PrefetchScalarGridSpec(
            num_scalar_prefetch=0,
            grid=(num_blocks,),
            in_specs=[
                pl.BlockSpec((TB, D), lambda i: (i, 0)),        # anchor
                pl.BlockSpec((TB, D), lambda i: (i, 0)),        # positive
                pl.BlockSpec((TB, N * D), lambda i: (i, 0)),    # negatives (flat)
            ],
            out_specs=pl.BlockSpec((1, TB), lambda i: (i, 0)),  # lane-dense output
        ),
        compiler_params=pltpu.CompilerParams(
            dimension_semantics=("parallel",),   # shards across both TCs on v7x
            vmem_limit_bytes=vmem_limit,
        ),
        cost_estimate=cost,
    )(anchor, positive, negatives_flat)

    # Final mean over the TRUE batch size; padded rows are sliced away.
    per_row = per_row.reshape(-1)[:B]
    return jnp.mean(per_row)


def _reference(anchor, positive, negatives, margin=0.2):
    """Pure-JAX reference mirroring torch.nn.CosineSimilarity semantics."""
    def cos(a, x):
        na = jnp.maximum(jnp.sqrt(jnp.sum(a * a, axis=-1)), _EPS)
        nx = jnp.maximum(jnp.sqrt(jnp.sum(x * x, axis=-1)), _EPS)
        return jnp.sum(a * x, axis=-1) / (na * nx)

    pos = cos(anchor, positive) + 1.0
    neg = jnp.mean(
        jnp.stack([cos(anchor, negatives[:, i]) + 1.0
                   for i in range(negatives.shape[1])], axis=0),
        axis=0,
    )
    loss = jnp.maximum(neg - pos + margin, 0.0)
    return jnp.mean(loss)


if __name__ == "__main__":
    key = jax.random.PRNGKey(0)
    k_a, k_p, k_n = jax.random.split(key, 3)

    B, N, D = 8, 4, 128   # batch, num negatives, embedding dim
    anchor = jax.random.normal(k_a, (B, D), dtype=jnp.float32)
    positive = jax.random.normal(k_p, (B, D), dtype=jnp.float32)
    negatives = jax.random.normal(k_n, (B, N, D), dtype=jnp.float32)

    loss = context_embedding_loss(anchor, positive, negatives, margin=0.2)
    jax.block_until_ready(loss)

    ref = _reference(anchor, positive, negatives, margin=0.2)
    assert jnp.allclose(loss, ref, atol=1e-5, rtol=1e-5), (loss, ref)

    print("KERNEL_OK")
</pallas_src>

<mosaic_0001>
module attributes {stable_mosaic.version = 11 : i64} {
  func.func @_loss_kernel(%arg0: i32, %arg1: memref<8x128xf32, #tpu.memory_space<vmem>>, %arg2: memref<8x128xf32, #tpu.memory_space<vmem>>, %arg3: memref<8x512xf32, #tpu.memory_space<vmem>>, %arg4: memref<1x8xf32, #tpu.memory_space<vmem>>) attributes {dimension_semantics = [#tpu.dimension_semantics<parallel>], iteration_bounds = array<i64: 1>, scalar_prefetch = 0 : i64, scratch_operands = 0 : i64, tpu.core_type = #tpu.core_type<tc>, window_params = [{transform_indices = @transform_0, window_bounds = array<i64: 8, 128>}, {transform_indices = @transform_1, window_bounds = array<i64: 8, 128>}, {transform_indices = @transform_2, window_bounds = array<i64: 8, 512>}, {transform_indices = @transform_3, window_bounds = array<i64: 1, 8>}]} {
    %c0 = arith.constant 0 : index
    %c0_0 = arith.constant 0 : index
    %0 = vector.load %arg1[%c0, %c0_0] : memref<8x128xf32, #tpu.memory_space<vmem>>, vector<8x128xf32>
    %c0_1 = arith.constant 0 : index
    %c0_2 = arith.constant 0 : index
    %1 = vector.load %arg2[%c0_1, %c0_2] : memref<8x128xf32, #tpu.memory_space<vmem>>, vector<8x128xf32>
    %2 = arith.mulf %0, %0 : vector<8x128xf32>
    %cst = arith.constant dense<0.000000e+00> : vector<8xf32>
    %3 = vector.multi_reduction <add>, %2, %cst [1] : vector<8x128xf32> to vector<8xf32>
    %4 = vector.shape_cast %3 : vector<8xf32> to vector<8x1xf32>
    %cst_3 = arith.constant 1.000000e-16 : f32
    %5 = vector.broadcast %cst_3 : f32 to vector<8x1xf32>
    %6 = arith.maximumf %4, %5 : vector<8x1xf32>
    %7 = math.rsqrt %6 : vector<8x1xf32>
    %8 = arith.mulf %1, %1 : vector<8x128xf32>
    %cst_4 = arith.constant dense<0.000000e+00> : vector<8xf32>
    %9 = vector.multi_reduction <add>, %8, %cst_4 [1] : vector<8x128xf32> to vector<8xf32>
    %10 = vector.shape_cast %9 : vector<8xf32> to vector<8x1xf32>
    %11 = arith.mulf %0, %1 : vector<8x128xf32>
    %cst_5 = arith.constant dense<0.000000e+00> : vector<8xf32>
    %12 = vector.multi_reduction <add>, %11, %cst_5 [1] : vector<8x128xf32> to vector<8xf32>
    %13 = vector.shape_cast %12 : vector<8xf32> to vector<8x1xf32>
    %14 = arith.mulf %13, %7 : vector<8x1xf32>
    %cst_6 = arith.constant 1.000000e-16 : f32
    %15 = vector.broadcast %cst_6 : f32 to vector<8x1xf32>
    %16 = arith.maximumf %10, %15 : vector<8x1xf32>
    %17 = math.rsqrt %16 : vector<8x1xf32>
    %18 = arith.mulf %14, %17 : vector<8x1xf32>
    %cst_7 = arith.constant 1.000000e+00 : f32
    %19 = vector.broadcast %cst_7 : f32 to vector<8x1xf32>
    %20 = arith.addf %18, %19 : vector<8x1xf32>
    %cst_8 = arith.constant 0.000000e+00 : f32
    %21 = vector.broadcast %cst_8 : f32 to vector<8x1xf32>
    %c0_9 = arith.constant 0 : index
    %c0_10 = arith.constant 0 : index
    %22 = vector.load %arg3[%c0_9, %c0_10] : memref<8x512xf32, #tpu.memory_space<vmem>>, vector<8x128xf32>
    %23 = arith.mulf %22, %22 : vector<8x128xf32>
    %cst_11 = arith.constant dense<0.000000e+00> : vector<8xf32>
    %24 = vector.multi_reduction <add>, %23, %cst_11 [1] : vector<8x128xf32> to vector<8xf32>
    %25 = vector.shape_cast %24 : vector<8xf32> to vector<8x1xf32>
    %26 = arith.mulf %0, %22 : vector<8x128xf32>
    %cst_12 = arith.constant dense<0.000000e+00> : vector<8xf32>
    %27 = vector.multi_reduction <add>, %26, %cst_12 [1] : vector<8x128xf32> to vector<8xf32>
    %28 = vector.shape_cast %27 : vector<8xf32> to vector<8x1xf32>
    %29 = arith.mulf %28, %7 : vector<8x1xf32>
    %cst_13 = arith.constant 1.000000e-16 : f32
    %30 = vector.broadcast %cst_13 : f32 to vector<8x1xf32>
    %31 = arith.maximumf %25, %30 : vector<8x1xf32>
    %32 = math.rsqrt %31 : vector<8x1xf32>
    %33 = arith.mulf %29, %32 : vector<8x1xf32>
    %cst_14 = arith.constant 1.000000e+00 : f32
    %34 = vector.broadcast %cst_14 : f32 to vector<8x1xf32>
    %35 = arith.addf %33, %34 : vector<8x1xf32>
    %36 = arith.addf %21, %35 : vector<8x1xf32>
    %c0_15 = arith.constant 0 : index
    %c128 = arith.constant 128 : index
    %37 = vector.load %arg3[%c0_15, %c128] : memref<8x512xf32, #tpu.memory_space<vmem>>, vector<8x128xf32>
    %38 = arith.mulf %37, %37 : vector<8x128xf32>
    %cst_16 = arith.constant dense<0.000000e+00> : vector<8xf32>
    %39 = vector.multi_reduction <add>, %38, %cst_16 [1] : vector<8x128xf32> to vector<8xf32>
    %40 = vector.shape_cast %39 : vector<8xf32> to vector<8x1xf32>
    %41 = arith.mulf %0, %37 : vector<8x128xf32>
    %cst_17 = arith.constant dense<0.000000e+00> : vector<8xf32>
    %42 = vector.multi_reduction <add>, %41, %cst_17 [1] : vector<8x128xf32> to vector<8xf32>
    %43 = vector.shape_cast %42 : vector<8xf32> to vector<8x1xf32>
    %44 = arith.mulf %43, %7 : vector<8x1xf32>
    %cst_18 = arith.constant 1.000000e-16 : f32
    %45 = vector.broadcast %cst_18 : f32 to vector<8x1xf32>
    %46 = arith.maximumf %40, %45 : vector<8x1xf32>
    %47 = math.rsqrt %46 : vector<8x1xf32>
    %48 = arith.mulf %44, %47 : vector<8x1xf32>
    %cst_19 = arith.constant 1.000000e+00 : f32
    %49 = vector.broadcast %cst_19 : f32 to vector<8x1xf32>
    %50 = arith.addf %48, %49 : vector<8x1xf32>
    %51 = arith.addf %36, %50 : vector<8x1xf32>
    %c0_20 = arith.constant 0 : index
    %c256 = arith.constant 256 : index
    %52 = vector.load %arg3[%c0_20, %c256] : memref<8x512xf32, #tpu.memory_space<vmem>>, vector<8x128xf32>
    %53 = arith.mulf %52, %52 : vector<8x128xf32>
    %cst_21 = arith.constant dense<0.000000e+00> : vector<8xf32>
    %54 = vector.multi_reduction <add>, %53, %cst_21 [1] : vector<8x128xf32> to vector<8xf32>
    %55 = vector.shape_cast %54 : vector<8xf32> to vector<8x1xf32>
    %56 = arith.mulf %0, %52 : vector<8x128xf32>
    %cst_22 = arith.constant dense<0.000000e+00> : vector<8xf32>
    %57 = vector.multi_reduction <add>, %56, %cst_22 [1] : vector<8x128xf32> to vector<8xf32>
    %58 = vector.shape_cast %57 : vector<8xf32> to vector<8x1xf32>
    %59 = arith.mulf %58, %7 : vector<8x1xf32>
    %cst_23 = arith.constant 1.000000e-16 : f32
    %60 = vector.broadcast %cst_23 : f32 to vector<8x1xf32>
    %61 = arith.maximumf %55, %60 : vector<8x1xf32>
    %62 = math.rsqrt %61 : vector<8x1xf32>
    %63 = arith.mulf %59, %62 : vector<8x1xf32>
    %cst_24 = arith.constant 1.000000e+00 : f32
    %64 = vector.broadcast %cst_24 : f32 to vector<8x1xf32>
    %65 = arith.addf %63, %64 : vector<8x1xf32>
    %66 = arith.addf %51, %65 : vector<8x1xf32>
    %c0_25 = arith.constant 0 : index
    %c384 = arith.constant 384 : index
    %67 = vector.load %arg3[%c0_25, %c384] : memref<8x512xf32, #tpu.memory_space<vmem>>, vector<8x128xf32>
    %68 = arith.mulf %67, %67 : vector<8x128xf32>
    %cst_26 = arith.constant dense<0.000000e+00> : vector<8xf32>
    %69 = vector.multi_reduction <add>, %68, %cst_26 [1] : vector<8x128xf32> to vector<8xf32>
    %70 = vector.shape_cast %69 : vector<8xf32> to vector<8x1xf32>
    %71 = arith.mulf %0, %67 : vector<8x128xf32>
    %cst_27 = arith.constant dense<0.000000e+00> : vector<8xf32>
    %72 = vector.multi_reduction <add>, %71, %cst_27 [1] : vector<8x128xf32> to vector<8xf32>
    %73 = vector.shape_cast %72 : vector<8xf32> to vector<8x1xf32>
    %74 = arith.mulf %73, %7 : vector<8x1xf32>
    %cst_28 = arith.constant 1.000000e-16 : f32
    %75 = vector.broadcast %cst_28 : f32 to vector<8x1xf32>
    %76 = arith.maximumf %70, %75 : vector<8x1xf32>
    %77 = math.rsqrt %76 : vector<8x1xf32>
    %78 = arith.mulf %74, %77 : vector<8x1xf32>
    %cst_29 = arith.constant 1.000000e+00 : f32
    %79 = vector.broadcast %cst_29 : f32 to vector<8x1xf32>
    %80 = arith.addf %78, %79 : vector<8x1xf32>
    %81 = arith.addf %66, %80 : vector<8x1xf32>
    %cst_30 = arith.constant 2.500000e-01 : f32
    %82 = vector.broadcast %cst_30 : f32 to vector<8x1xf32>
    %83 = arith.mulf %81, %82 : vector<8x1xf32>
    %84 = arith.subf %83, %20 : vector<8x1xf32>
    %cst_31 = arith.constant 2.000000e-01 : f32
    %85 = vector.broadcast %cst_31 : f32 to vector<8x1xf32>
    %86 = arith.addf %84, %85 : vector<8x1xf32>
    %cst_32 = arith.constant 0.000000e+00 : f32
    %87 = vector.broadcast %cst_32 : f32 to vector<8x1xf32>
    %88 = arith.maximumf %86, %87 : vector<8x1xf32>
    %89 = vector.shape_cast %88 : vector<8x1xf32> to vector<1x8xf32>
    %c0_33 = arith.constant 0 : index
    %c0_34 = arith.constant 0 : index
    %90 = vector.load %arg4[%c0_33, %c0_34] : memref<1x8xf32, #tpu.memory_space<vmem>>, vector<1x8xf32>
    tpu.vector_store %arg4[%c0_33, %c0_34], %89 {strides = array<i32>} : memref<1x8xf32, #tpu.memory_space<vmem>>, vector<1x8xf32>,
    return
  }
  func.func @transform_0(%arg0: i32) -> (i32, i32) {
    %c0_i32 = arith.constant 0 : i32
    %c0_i32_0 = arith.constant 0 : i32
    return %arg0, %c0_i32 : i32, i32
  }
  func.func @transform_1(%arg0: i32) -> (i32, i32) {
    %c0_i32 = arith.constant 0 : i32
    %c0_i32_0 = arith.constant 0 : i32
    return %arg0, %c0_i32 : i32, i32
  }
  func.func @transform_2(%arg0: i32) -> (i32, i32) {
    %c0_i32 = arith.constant 0 : i32
    %c0_i32_0 = arith.constant 0 : i32
    return %arg0, %c0_i32 : i32, i32
  }
  func.func @transform_3(%arg0: i32) -> (i32, i32) {
    %c0_i32 = arith.constant 0 : i32
    %c0_i32_0 = arith.constant 0 : i32
    return %arg0, %c0_i32 : i32, i32
  }
}

</mosaic_0001>

<llo_original>
// kernel: tpu_custom_call.1
$region0: #{tpu_custom_call.1}
  #allocation0 [shape = 'u32[]', space=smem, size = 0x4, offset = 0x4, fixed_abs, tag = 'smem constant byte address 0x4 - core index']
  #allocation1 [shape = 'u32[144,128]{1,0:T(1,128)}', space=vmem, size = 0x12000, scoped, tag = 'internal scratch']
  %s0 = inlined_call_operand.hbm [shape: f32[8,128], index: 0, kind: input, shape index: {}]
  %s1 = inlined_call_operand.hbm [shape: f32[8,128], index: 1, kind: input, shape index: {}]
  %s2 = inlined_call_operand.hbm [shape: f32[8,512], index: 2, kind: input, shape index: {}]
  %s3 = inlined_call_operand.hbm [shape: f32[1,8], index: 3, kind: output, shape index: {}]
  %s4 = sld [smem:[#allocation0]]
  $region34: #{tpu_custom_call.1} parent=0
    _
  %s6 = ssub.s32 1, %s4
  %s7 = scalar_select 0, %s6, %s4
  $region1: #{tpu_custom_call.1} parent=0
    #allocation2 [shape = 'u8[4096]{0}', space=vmem, size = 0x1000, scoped, tag = 'input window, operand 0, single buffered']
    #allocation3 [shape = 's32[1]{0}', space=sflag, size = 0x4, scoped, tag = 'scoped memory for tpu_custom_call.1']
    #allocation4 [shape = 's32[1]{0}', space=sflag, size = 0x4, scoped, tag = 'scoped memory for tpu_custom_call.1']
    #allocation5 [shape = 'u8[4096]{0}', space=vmem, size = 0x1000, scoped, tag = 'input window, operand 1, single buffered']
    #allocation6 [shape = 's32[1]{0}', space=sflag, size = 0x4, scoped, tag = 'scoped memory for tpu_custom_call.1']
    #allocation7 [shape = 'u8[16384]{0}', space=vmem, size = 0x4000, scoped, tag = 'input window, operand 2, single buffered']
    #allocation8 [shape = 'u8[512]{0}', space=vmem, size = 0x400, scoped, tag = 'output window, operand 0, single buffered']
    %8 = vsyncpa [#allocation3], 0
    %9 = vsyncpa [#allocation6], 0
    %10 = vsyncpa [#allocation4], 0
    // Predicated region
    $region2: #{tpu_custom_call.1} parent=1 // pred_check
      _
    $region3: #{tpu_custom_call.1} parent=1 // pred_check_branch
      %12 = sbr.rel (0) target = $region5
    $region4: #{tpu_custom_call.1} parent=1 // pred_region
      %s14 = ssub.s32 128, 128
      %15 = vsyncadd [#allocation3], %s14
      %s17 = sshll.u32 [#allocation2], 4
      %s18 = int_to_ptr.vmem [resolvable:$true] %s17
      %20 = dma.hbm_to_vmem [thread:$0]  %s0, 128, %s18, [#allocation3]
    $region5: #{tpu_custom_call.1} parent=1 // pred_fallthru
      _
    // Predicated region
    $region6: #{tpu_custom_call.1} parent=1 // pred_check
      _
    $region7: #{tpu_custom_call.1} parent=1 // pred_check_branch
      %22 = sbr.rel (0) target = $region9
    $region8: #{tpu_custom_call.1} parent=1 // pred_region
      %s24 = ssub.s32 128, 128
      %25 = vsyncadd [#allocation6], %s24
      %s27 = sshll.u32 [#allocation5], 4
      %s28 = int_to_ptr.vmem [resolvable:$true] %s27
      %30 = dma.hbm_to_vmem [thread:$0]  %s1, 128, %s28, [#allocation6]
    $region9: #{tpu_custom_call.1} parent=1 // pred_fallthru
      _
    // Predicated region
    $region10: #{tpu_custom_call.1} parent=1 // pred_check
      _
    $region11: #{tpu_custom_call.1} parent=1 // pred_check_branch
      %32 = sbr.rel (0) target = $region13
    $region12: #{tpu_custom_call.1} parent=1 // pred_region
      %s34 = ssub.s32 512, 512
      %35 = vsyncadd [#allocation6], %s34
      %s37 = sshll.u32 [#allocation7], 4
      %s38 = int_to_ptr.vmem [resolvable:$true] %s37
      %40 = dma.hbm_to_vmem [thread:$0]  %s2, 512, %s38, [#allocation6]
    $region13: #{tpu_custom_call.1} parent=1 // pred_fallthru
      _
    // Predicated region
    $region14: #{tpu_custom_call.1} parent=1 // pred_check
      _
    $region15: #{tpu_custom_call.1} parent=1 // pred_check_branch
      %42 = sbr.rel (0) target = $region17
    $region16: #{tpu_custom_call.1} parent=1 // pred_region
      %43 = dma.done [#allocation3], 128
    $region17: #{tpu_custom_call.1} parent=1 // pred_fallthru
      _
    // Predicated region
    $region18: #{tpu_custom_call.1} parent=1 // pred_check
      _
    $region19: #{tpu_custom_call.1} parent=1 // pred_check_branch
      %45 = sbr.rel (0) target = $region21
    $region20: #{tpu_custom_call.1} parent=1 // pred_region
      %46 = dma.done [#allocation6], 128
    $region21: #{tpu_custom_call.1} parent=1 // pred_fallthru
      _
    // Predicated region
    $region22: #{tpu_custom_call.1} parent=1 // pred_check
      _
    $region23: #{tpu_custom_call.1} parent=1 // pred_check_branch
      %48 = sbr.rel (0) target = $region25
    $region24: #{tpu_custom_call.1} parent=1 // pred_region
      %49 = dma.done [#allocation6], 512
    $region25: #{tpu_custom_call.1} parent=1 // pred_fallthru
      _
    %v50 = vld [vmem:[#allocation2] sm:$0xff]
    %v51 = vld [vmem:[#allocation5] sm:$0xff]
    %v52 = vmul.f32 %v50, %v50
    %53 = vadd.xlane.f32.xlu0 %v52
    %v54 = vpop.xlane.xlu0 %53
    %v55 = vmax.f32 %v54, 1e-16
    %v56 = vrsqrt.pop %v55
    %v57 = vmul.f32 %v51, %v51
    %58 = vadd.xlane.f32.xlu0 %v57
    %v59 = vpop.xlane.xlu0 %58
    %v60 = vmul.f32 %v50, %v51
    %61 = vadd.xlane.f32.xlu0 %v60
    %v62 = vpop.xlane.xlu0 %61
    %v63 = vmul.f32 %v62, %v56
    %v64 = vmax.f32 %v59, 1e-16
    %v65 = vrsqrt.pop %v64
    %v66 = vmul.f32 %v63, %v65
    %v67 = vadd.f32 %v66, 1.0
    %v68 = vld [vmem:[#allocation7] sm:$0xff]
    %v69 = vmul.f32 %v68, %v68
    %70 = vadd.xlane.f32.xlu0 %v69
    %v71 = vpop.xlane.xlu0 %70
    %v72 = vmul.f32 %v50, %v68
    %73 = vadd.xlane.f32.xlu0 %v72
    %v74 = vpop.xlane.xlu0 %73
    %v75 = vmul.f32 %v74, %v56
    %v76 = vmax.f32 %v71, 1e-16
    %v77 = vrsqrt.pop %v76
    %v78 = vmul.f32 %v75, %v77
    %v79 = vadd.f32 %v78, 1.0
    %v80 = vadd.f32 %v79, 0.0
    %v81 = vld [vmem:[#allocation7 + $0x8] sm:$0xff]
    %v82 = vmul.f32 %v81, %v81
    %83 = vadd.xlane.f32.xlu0 %v82
    %v84 = vpop.xlane.xlu0 %83
    %v85 = vmul.f32 %v50, %v81
    %86 = vadd.xlane.f32.xlu0 %v85
    %v87 = vpop.xlane.xlu0 %86
    %v88 = vmul.f32 %v87, %v56
    %v89 = vmax.f32 %v84, 1e-16
    %v90 = vrsqrt.pop %v89
    %v91 = vmul.f32 %v88, %v90
    %v92 = vadd.f32 %v91, 1.0
    %v93 = vadd.f32 %v80, %v92
    %v94 = vld [vmem:[#allocation7 + $0x10] sm:$0xff]
    %v95 = vmul.f32 %v94, %v94
    %96 = vadd.xlane.f32.xlu0 %v95
    %v97 = vpop.xlane.xlu0 %96
    %v98 = vmul.f32 %v50, %v94
    %99 = vadd.xlane.f32.xlu0 %v98
    %v100 = vpop.xlane.xlu0 %99
    %v101 = vmul.f32 %v100, %v56
    %v102 = vmax.f32 %v97, 1e-16
    %v103 = vrsqrt.pop %v102
    %v104 = vmul.f32 %v101, %v103
    %v105 = vadd.f32 %v104, 1.0
    %v106 = vadd.f32 %v93, %v105
    %v107 = vld [vmem:[#allocation7 + $0x18] sm:$0xff]
    %v108 = vmul.f32 %v107, %v107
    %109 = vadd.xlane.f32.xlu0 %v108
    %v110 = vpop.xlane.xlu0 %109
    %v111 = vmul.f32 %v50, %v107
    %112 = vadd.xlane.f32.xlu0 %v111
    %v113 = vpop.xlane.xlu0 %112
    %v114 = vmul.f32 %v113, %v56
    %v115 = vmax.f32 %v110, 1e-16
    %v116 = vrsqrt.pop %v115
    %v117 = vmul.f32 %v114, %v116
    %v118 = vadd.f32 %v117, 1.0
    %v119 = vadd.f32 %v106, %v118
    %v120 = vmul.f32 %v119, 0.25
    %v121 = vsub.f32 %v120, %v67
    %v122 = vadd.f32 %v121, 0.2
    %v123 = vmax.f32 %v122, 0.0
    %v125 = vlaneseq
    %v126 = vand.u32 %v125, 127
    %v127 = vlaneseq
    %v128 = vshrl.u32 %v127, 7
    %v129 = vsub.s32 %v126, %v128
    %v130 = vrot.slane %v123, %v129
    %vm132 = vcmask 57344
    %133 = vst.msk [vmem:[#allocation8] sm:$0x1] %vm132, %v130
    // Predicated region
    $region26: #{tpu_custom_call.1} parent=1 // pred_check
      _
    $region27: #{tpu_custom_call.1} parent=1 // pred_check_branch
      %135 = sbr.rel (0) target = $region29
    $region28: #{tpu_custom_call.1} parent=1 // pred_region
      %s137 = ssub.s32 16, 16
      %138 = vsyncadd [#allocation4], %s137
      %s140 = sshll.u32 [#allocation8], 4
      %s141 = int_to_ptr.vmem [resolvable:$true] %s140
      %143 = dma.vmem_to_hbm [thread:$0]  %s141, 16, %s3, [#allocation4]
    $region29: #{tpu_custom_call.1} parent=1 // pred_fallthru
      _
    // Predicated region
    $region30: #{tpu_custom_call.1} parent=1 // pred_check
      _
    $region31: #{tpu_custom_call.1} parent=1 // pred_check_branch
      %145 = sbr.rel (0) target = $region33
    $region32: #{tpu_custom_call.1} parent=1 // pred_region
      %146 = dma.done [#allocation4], 16
    $region33: #{tpu_custom_call.1} parent=1 // pred_fallthru
      _
    %147 = vsyncpa [#allocation3], 1
    %148 = vsyncpa [#allocation6], 1
    %149 = vsyncpa [#allocation4], 1

</llo_original>
